<compile_context>
chip_gen: v6e
topology: v6e:2x2x1
jax: 0.10.0
libtpu: 0.0.40
codegen_flags: <defaults>
</compile_context>

<pallas_src>
import functools

import jax
import jax.numpy as jnp
from jax import lax
from jax.experimental import pallas as pl
from jax.experimental.pallas import tpu as pltpu

LN_EPS = 1e-5  # PyTorch nn.LayerNorm default eps

# Set to jnp.bfloat16 for ~2x MXU throughput on the gather/scatter one-hot
# matmuls (0/1 one-hots are exact in bf16; gathered features get rounded, so
# use a looser tolerance).  Keep f32 for faithful comparison to the reference.
ONE_HOT_DTYPE = jnp.float32


def _round_up(n, m):
    return pl.cdiv(n, m) * m


def _mp_kernel(x_full_ref, x_tile_ref, send_ref, recv_ref,
               w1a_ref, w1b_ref, b1_ref,
               w2_ref, b2_ref,
               w3_ref, b3_ref,
               w4_ref, b4_ref,
               gamma_ref, beta_ref,
               out_ref, acc_ref):
    i = pl.program_id(0)                    # node-tile index   ("parallel")
    j = pl.program_id(1)                    # edge-tile index   ("arbitrary", last)
    tm = out_ref.shape[0]                   # node tile rows
    te = send_ref.shape[0]                  # edge tile
    n_pad = x_full_ref.shape[0]

    @pl.when(j == 0)
    def _():
        acc_ref[...] = jnp.zeros_like(acc_ref)

    senders = send_ref[...]                 # (te, 1)  int32, -1 = padding
    receivers = recv_ref[...]               # (1, te)  int32, -1 = padding

    # ---- gather: x[senders] for this edge block via (te, n_pad) one-hot ----
    node_ids = lax.broadcasted_iota(jnp.int32, (te, n_pad), 1)
    send_oh = (node_ids == senders).astype(ONE_HOT_DTYPE)            # (te, n_pad)
    gathered = jnp.dot(send_oh, x_full_ref[...].astype(ONE_HOT_DTYPE),
                       preferred_element_type=jnp.float32)           # (te, L) f32

    # ---- scatter-add into this node tile via (tm, te) one-hot --------------
    local_rows = lax.broadcasted_iota(jnp.int32, (tm, te), 0) + i * tm
    recv_oh = (local_rows == receivers).astype(ONE_HOT_DTYPE)        # (tm, te)
    acc_ref[...] += jnp.dot(recv_oh, gathered.astype(ONE_HOT_DTYPE),
                            preferred_element_type=jnp.float32)      # (tm, L)

    # ---- finalize: fused MLP + LayerNorm on the node tile -------------------
    @pl.when(j == pl.num_programs(1) - 1)
    def _():
        x_tile = x_tile_ref[...]                                     # (tm, L) f32
        agg = acc_ref[...]

        # concat([x, agg], -1) @ W1 == x @ W1[:L] + agg @ W1[L:]
        h = (jnp.dot(x_tile, w1a_ref[...], preferred_element_type=jnp.float32)
             + jnp.dot(agg, w1b_ref[...], preferred_element_type=jnp.float32)
             + b1_ref[...])
        h = jnp.maximum(h, 0.0)
        h = jnp.maximum(
            jnp.dot(h, w2_ref[...], preferred_element_type=jnp.float32) + b2_ref[...], 0.0)
        h = jnp.maximum(
            jnp.dot(h, w3_ref[...], preferred_element_type=jnp.float32) + b3_ref[...], 0.0)
        h = jnp.dot(h, w4_ref[...], preferred_element_type=jnp.float32) + b4_ref[...]

        # LayerNorm over the feature dim (f32).
        mean = jnp.mean(h, axis=-1, keepdims=True)
        var = jnp.mean(jnp.square(h - mean), axis=-1, keepdims=True)
        h = (h - mean) * lax.rsqrt(var + LN_EPS)
        out_ref[...] = h * gamma_ref[...] + beta_ref[...]


@functools.partial(jax.jit, static_argnames=("node_tile", "edge_tile"))
def message_passing(x, edge_index, params, *, node_tile=256, edge_tile=512):
    """x: (N, L) f32; edge_index: (2, E) int (row0=senders, row1=receivers)."""
    N, L = x.shape
    E = edge_index.shape[1]

    # Tile sizes (clamped for small problems): node tile multiple of 8
    # (sublanes), edge tile multiple of 128 (lanes).
    tm = int(min(node_tile, _round_up(N, 8)))
    te = int(min(edge_tile, _round_up(E, 128)))
    n_pad = int(_round_up(N, tm))
    e_pad = int(_round_up(E, te))

    x_p = jnp.pad(x.astype(jnp.float32), ((0, n_pad - N), (0, 0)))
    senders = edge_index[0].astype(jnp.int32)
    receivers = edge_index[1].astype(jnp.int32)
    # Padded edges get index -1 -> match no node -> contribute nothing.
    senders_col = jnp.pad(senders, (0, e_pad - E),
                          constant_values=-1).reshape(e_pad, 1)
    receivers_row = jnp.pad(receivers, (0, e_pad - E),
                            constant_values=-1).reshape(1, e_pad)

    w1, b1, w2, b2, w3, b3, w4, b4, gamma, beta = params
    w1a, w1b = w1[:L], w1[L:]
    weight_args = (w1a, w1b, b1.reshape(1, L),
                   w2, b2.reshape(1, L),
                   w3, b3.reshape(1, L),
                   w4, b4.reshape(1, L),
                   gamma.reshape(1, L), beta.reshape(1, L))

    def const_spec(shape):
        return pl.BlockSpec(shape, lambda i, j: (0, 0))

    grid = (n_pad // tm, e_pad // te)
    grid_spec = pltpu.PrefetchScalarGridSpec(
        num_scalar_prefetch=0,
        grid=grid,
        in_specs=[
            const_spec((n_pad, L)),                          # x (resident, gather source)
            pl.BlockSpec((tm, L), lambda i, j: (i, 0)),      # x node tile (MLP input)
            pl.BlockSpec((te, 1), lambda i, j: (j, 0)),      # senders   (edge-tiled)
            pl.BlockSpec((1, te), lambda i, j: (0, j)),      # receivers (edge-tiled)
        ] + [const_spec(w.shape) for w in weight_args],      # weights stay resident
        out_specs=pl.BlockSpec((tm, L), lambda i, j: (i, 0)),
        scratch_shapes=[pltpu.VMEM((tm, L), jnp.float32)],   # agg accumulator
    )

    out = pl.pallas_call(
        _mp_kernel,
        out_shape=jax.ShapeDtypeStruct((n_pad, L), jnp.float32),
        grid_spec=grid_spec,
        compiler_params=pltpu.CompilerParams(
            dimension_semantics=("parallel", "arbitrary"),
            vmem_limit_bytes=32 * 1024 * 1024),
    )(x_p, x_p, senders_col, receivers_row, *weight_args)
    return out[:N]


def reference(x, edge_index, params):
    """Pure-JAX reference mirroring the PyTorch forward."""
    senders, receivers = edge_index
    N = x.shape[0]
    agg = jax.ops.segment_sum(x[senders], receivers, num_segments=N)
    h = jnp.concatenate([x, agg], axis=-1)
    w1, b1, w2, b2, w3, b3, w4, b4, gamma, beta = params
    h = jnp.maximum(h @ w1 + b1, 0.0)
    h = jnp.maximum(h @ w2 + b2, 0.0)
    h = jnp.maximum(h @ w3 + b3, 0.0)
    h = h @ w4 + b4
    mean = h.mean(-1, keepdims=True)
    var = ((h - mean) ** 2).mean(-1, keepdims=True)
    return (h - mean) / jnp.sqrt(var + LN_EPS) * gamma + beta


if __name__ == "__main__":
    L = 32   # latent_dim_size
    N = 16   # num_nodes
    E = 24   # num_edges

    key = jax.random.PRNGKey(0)
    k = jax.random.split(key, 16)
    x = jax.random.normal(k[0], (N, L), jnp.float32)
    senders = jax.random.randint(k[1], (E,), 0, N, jnp.int32)
    receivers = jax.random.randint(k[2], (E,), 0, N, jnp.int32)
    edge_index = jnp.stack([senders, receivers], axis=0)

    def linear_init(kw, kb, fan_in, fan_out):
        # PyTorch nn.Linear default: U(-1/sqrt(fan_in), 1/sqrt(fan_in)); stored (in, out).
        bound = 1.0 / jnp.sqrt(jnp.float32(fan_in))
        w = jax.random.uniform(kw, (fan_in, fan_out), jnp.float32, -bound, bound)
        b = jax.random.uniform(kb, (fan_out,), jnp.float32, -bound, bound)
        return w, b

    w1, b1 = linear_init(k[3], k[4], 2 * L, L)
    w2, b2 = linear_init(k[5], k[6], L, L)
    w3, b3 = linear_init(k[7], k[8], L, L)
    w4, b4 = linear_init(k[9], k[10], L, L)
    gamma = jnp.ones((L,), jnp.float32)   # LayerNorm weight
    beta = jnp.zeros((L,), jnp.float32)   # LayerNorm bias
    params = (w1, b1, w2, b2, w3, b3, w4, b4, gamma, beta)

    out = jax.block_until_ready(message_passing(x, edge_index, params))
    ref = reference(x, edge_index, params)

    assert out.shape == (N, L) and out.dtype == jnp.float32
    assert jnp.allclose(out, ref, atol=1e-4, rtol=1e-4), "mismatch vs JAX reference"
    print("KERNEL_OK")
</pallas_src>

<mosaic_0001>
module attributes {stable_mosaic.version = 11 : i64} {
  func.func @_mp_kernel(%arg0: i32, %arg1: i32, %arg2: memref<16x32xf32, #tpu.memory_space<vmem>>, %arg3: memref<16x32xf32, #tpu.memory_space<vmem>>, %arg4: memref<128x1xi32, #tpu.memory_space<vmem>>, %arg5: memref<1x128xi32, #tpu.memory_space<vmem>>, %arg6: memref<32x32xf32, #tpu.memory_space<vmem>>, %arg7: memref<32x32xf32, #tpu.memory_space<vmem>>, %arg8: memref<1x32xf32, #tpu.memory_space<vmem>>, %arg9: memref<32x32xf32, #tpu.memory_space<vmem>>, %arg10: memref<1x32xf32, #tpu.memory_space<vmem>>, %arg11: memref<32x32xf32, #tpu.memory_space<vmem>>, %arg12: memref<1x32xf32, #tpu.memory_space<vmem>>, %arg13: memref<32x32xf32, #tpu.memory_space<vmem>>, %arg14: memref<1x32xf32, #tpu.memory_space<vmem>>, %arg15: memref<1x32xf32, #tpu.memory_space<vmem>>, %arg16: memref<1x32xf32, #tpu.memory_space<vmem>>, %arg17: memref<16x32xf32, #tpu.memory_space<vmem>>, %arg18: memref<16x32xf32, #tpu.memory_space<vmem>>) attributes {dimension_semantics = [#tpu.dimension_semantics<parallel>, #tpu.dimension_semantics<arbitrary>], iteration_bounds = array<i64: 1, 1>, scalar_prefetch = 0 : i64, scratch_operands = 1 : i64, tpu.core_type = #tpu.core_type<tc>, window_params = [{pipeline_mode = #tpu.pipeline_mode<synchronous>, transform_indices = @transform_0, window_bounds = array<i64: 16, 32>}, {transform_indices = @transform_1, window_bounds = array<i64: 16, 32>}, {transform_indices = @transform_2, window_bounds = array<i64: 128, 1>}, {transform_indices = @transform_3, window_bounds = array<i64: 1, 128>}, {pipeline_mode = #tpu.pipeline_mode<synchronous>, transform_indices = @transform_4, window_bounds = array<i64: 32, 32>}, {pipeline_mode = #tpu.pipeline_mode<synchronous>, transform_indices = @transform_5, window_bounds = array<i64: 32, 32>}, {pipeline_mode = #tpu.pipeline_mode<synchronous>, transform_indices = @transform_6, window_bounds = array<i64: 1, 32>}, {pipeline_mode = #tpu.pipeline_mode<synchronous>, transform_indices = @transform_7, window_bounds = array<i64: 32, 32>}, {pipeline_mode = #tpu.pipeline_mode<synchronous>, transform_indices = @transform_8, window_bounds = array<i64: 1, 32>}, {pipeline_mode = #tpu.pipeline_mode<synchronous>, transform_indices = @transform_9, window_bounds = array<i64: 32, 32>}, {pipeline_mode = #tpu.pipeline_mode<synchronous>, transform_indices = @transform_10, window_bounds = array<i64: 1, 32>}, {pipeline_mode = #tpu.pipeline_mode<synchronous>, transform_indices = @transform_11, window_bounds = array<i64: 32, 32>}, {pipeline_mode = #tpu.pipeline_mode<synchronous>, transform_indices = @transform_12, window_bounds = array<i64: 1, 32>}, {pipeline_mode = #tpu.pipeline_mode<synchronous>, transform_indices = @transform_13, window_bounds = array<i64: 1, 32>}, {pipeline_mode = #tpu.pipeline_mode<synchronous>, transform_indices = @transform_14, window_bounds = array<i64: 1, 32>}, {transform_indices = @transform_15, window_bounds = array<i64: 16, 32>}]} {
    %c0_i32 = arith.constant 0 : i32
    %0 = arith.cmpi eq, %arg1, %c0_i32 : i32
    %1 = arith.extui %0 : i1 to i32
    %c0_i32_0 = arith.constant 0 : i32
    %2 = arith.cmpi ne, %1, %c0_i32_0 : i32
    scf.if %2 {
      %cst_13 = arith.constant 0.000000e+00 : f32
      %27 = vector.broadcast %cst_13 : f32 to vector<16x32xf32>
      %c0_14 = arith.constant 0 : index
      %c0_15 = arith.constant 0 : index
      %28 = vector.load %arg18[%c0_14, %c0_15] : memref<16x32xf32, #tpu.memory_space<vmem>>, vector<16x32xf32>
      tpu.vector_store %arg18[%c0_14, %c0_15], %27 {strides = array<i32>} : memref<16x32xf32, #tpu.memory_space<vmem>>, vector<16x32xf32>,
    } else {
    }
    %c0 = arith.constant 0 : index
    %c0_1 = arith.constant 0 : index
    %3 = vector.load %arg4[%c0, %c0_1] : memref<128x1xi32, #tpu.memory_space<vmem>>, vector<128x1xi32>
    %c0_2 = arith.constant 0 : index
    %c0_3 = arith.constant 0 : index
    %4 = vector.load %arg5[%c0_2, %c0_3] : memref<1x128xi32, #tpu.memory_space<vmem>>, vector<1x128xi32>
    %5 = tpu.iota {dimensions = array<i32: 1>} : vector<128x16xi32>
    %6 = vector.broadcast %3 : vector<128x1xi32> to vector<128x16xi32>
    %7 = arith.cmpi eq, %5, %6 : vector<128x16xi32>
    %8 = arith.extui %7 : vector<128x16xi1> to vector<128x16xi32>
    %9 = arith.sitofp %8 : vector<128x16xi32> to vector<128x16xf32>
    %c0_4 = arith.constant 0 : index
    %c0_5 = arith.constant 0 : index
    %10 = vector.load %arg2[%c0_4, %c0_5] : memref<16x32xf32, #tpu.memory_space<vmem>>, vector<16x32xf32>
    %cst = arith.constant dense<0.000000e+00> : vector<128x32xf32>
    %11 = tpu.matmul %9, %10, %cst {dimension_numbers = #tpu.dot_dimension_numbers<[1], [0], [0], [1], [0, 0, 1, 1], [], []>} : vector<128x16xf32>, vector<16x32xf32>, vector<128x32xf32> -> vector<128x32xf32>
    %12 = tpu.iota {dimensions = array<i32: 0>} : vector<16x128xi32>
    %c16_i32 = arith.constant 16 : i32
    %13 = arith.muli %arg0, %c16_i32 : i32
    %14 = vector.broadcast %13 : i32 to vector<16x128xi32>
    %15 = arith.addi %12, %14 : vector<16x128xi32>
    %16 = vector.broadcast %4 : vector<1x128xi32> to vector<16x128xi32>
    %17 = arith.cmpi eq, %15, %16 : vector<16x128xi32>
    %18 = arith.extui %17 : vector<16x128xi1> to vector<16x128xi32>
    %19 = arith.sitofp %18 : vector<16x128xi32> to vector<16x128xf32>
    %c0_6 = arith.constant 0 : index
    %c0_7 = arith.constant 0 : index
    %20 = vector.load %arg18[%c0_6, %c0_7] : memref<16x32xf32, #tpu.memory_space<vmem>>, vector<16x32xf32>
    %cst_8 = arith.constant dense<0.000000e+00> : vector<16x32xf32>
    %21 = tpu.matmul %19, %11, %cst_8 {dimension_numbers = #tpu.dot_dimension_numbers<[1], [0], [0], [1], [0, 0, 1, 1], [], []>} : vector<16x128xf32>, vector<128x32xf32>, vector<16x32xf32> -> vector<16x32xf32>
    %22 = arith.addf %20, %21 : vector<16x32xf32>
    %c0_9 = arith.constant 0 : index
    %c0_10 = arith.constant 0 : index
    %23 = vector.load %arg18[%c0_9, %c0_10] : memref<16x32xf32, #tpu.memory_space<vmem>>, vector<16x32xf32>
    tpu.vector_store %arg18[%c0_9, %c0_10], %22 {strides = array<i32>} : memref<16x32xf32, #tpu.memory_space<vmem>>, vector<16x32xf32>,
    %c0_i32_11 = arith.constant 0 : i32
    %24 = arith.cmpi eq, %arg1, %c0_i32_11 : i32
    %25 = arith.extui %24 : i1 to i32
    %c0_i32_12 = arith.constant 0 : i32
    %26 = arith.cmpi ne, %25, %c0_i32_12 : i32
    scf.if %26 {
      %c0_13 = arith.constant 0 : index
      %c0_14 = arith.constant 0 : index
      %27 = vector.load %arg3[%c0_13, %c0_14] : memref<16x32xf32, #tpu.memory_space<vmem>>, vector<16x32xf32>
      %c0_15 = arith.constant 0 : index
      %c0_16 = arith.constant 0 : index
      %28 = vector.load %arg18[%c0_15, %c0_16] : memref<16x32xf32, #tpu.memory_space<vmem>>, vector<16x32xf32>
      %c0_17 = arith.constant 0 : index
      %c0_18 = arith.constant 0 : index
      %29 = vector.load %arg6[%c0_17, %c0_18] : memref<32x32xf32, #tpu.memory_space<vmem>>, vector<32x32xf32>
      %cst_19 = arith.constant dense<0.000000e+00> : vector<16x32xf32>
      %30 = tpu.matmul %27, %29, %cst_19 {dimension_numbers = #tpu.dot_dimension_numbers<[1], [0], [0], [1], [0, 0, 1, 1], [], []>} : vector<16x32xf32>, vector<32x32xf32>, vector<16x32xf32> -> vector<16x32xf32>
      %c0_20 = arith.constant 0 : index
      %c0_21 = arith.constant 0 : index
      %31 = vector.load %arg7[%c0_20, %c0_21] : memref<32x32xf32, #tpu.memory_space<vmem>>, vector<32x32xf32>
      %cst_22 = arith.constant dense<0.000000e+00> : vector<16x32xf32>
      %32 = tpu.matmul %28, %31, %cst_22 {dimension_numbers = #tpu.dot_dimension_numbers<[1], [0], [0], [1], [0, 0, 1, 1], [], []>} : vector<16x32xf32>, vector<32x32xf32>, vector<16x32xf32> -> vector<16x32xf32>
      %33 = arith.addf %30, %32 : vector<16x32xf32>
      %c0_23 = arith.constant 0 : index
      %c0_24 = arith.constant 0 : index
      %34 = vector.load %arg8[%c0_23, %c0_24] : memref<1x32xf32, #tpu.memory_space<vmem>>, vector<1x32xf32>
      %35 = vector.broadcast %34 : vector<1x32xf32> to vector<16x32xf32>
      %36 = arith.addf %33, %35 : vector<16x32xf32>
      %cst_25 = arith.constant 0.000000e+00 : f32
      %37 = vector.broadcast %cst_25 : f32 to vector<16x32xf32>
      %38 = arith.maximumf %36, %37 : vector<16x32xf32>
      %c0_26 = arith.constant 0 : index
      %c0_27 = arith.constant 0 : index
      %39 = vector.load %arg9[%c0_26, %c0_27] : memref<32x32xf32, #tpu.memory_space<vmem>>, vector<32x32xf32>
      %cst_28 = arith.constant dense<0.000000e+00> : vector<16x32xf32>
      %40 = tpu.matmul %38, %39, %cst_28 {dimension_numbers = #tpu.dot_dimension_numbers<[1], [0], [0], [1], [0, 0, 1, 1], [], []>} : vector<16x32xf32>, vector<32x32xf32>, vector<16x32xf32> -> vector<16x32xf32>
      %c0_29 = arith.constant 0 : index
      %c0_30 = arith.constant 0 : index
      %41 = vector.load %arg10[%c0_29, %c0_30] : memref<1x32xf32, #tpu.memory_space<vmem>>, vector<1x32xf32>
      %42 = vector.broadcast %41 : vector<1x32xf32> to vector<16x32xf32>
      %43 = arith.addf %40, %42 : vector<16x32xf32>
      %cst_31 = arith.constant 0.000000e+00 : f32
      %44 = vector.broadcast %cst_31 : f32 to vector<16x32xf32>
      %45 = arith.maximumf %43, %44 : vector<16x32xf32>
      %c0_32 = arith.constant 0 : index
      %c0_33 = arith.constant 0 : index
      %46 = vector.load %arg11[%c0_32, %c0_33] : memref<32x32xf32, #tpu.memory_space<vmem>>, vector<32x32xf32>
      %cst_34 = arith.constant dense<0.000000e+00> : vector<16x32xf32>
      %47 = tpu.matmul %45, %46, %cst_34 {dimension_numbers = #tpu.dot_dimension_numbers<[1], [0], [0], [1], [0, 0, 1, 1], [], []>} : vector<16x32xf32>, vector<32x32xf32>, vector<16x32xf32> -> vector<16x32xf32>
      %c0_35 = arith.constant 0 : index
      %c0_36 = arith.constant 0 : index
      %48 = vector.load %arg12[%c0_35, %c0_36] : memref<1x32xf32, #tpu.memory_space<vmem>>, vector<1x32xf32>
      %49 = vector.broadcast %48 : vector<1x32xf32> to vector<16x32xf32>
      %50 = arith.addf %47, %49 : vector<16x32xf32>
      %cst_37 = arith.constant 0.000000e+00 : f32
      %51 = vector.broadcast %cst_37 : f32 to vector<16x32xf32>
      %52 = arith.maximumf %50, %51 : vector<16x32xf32>
      %c0_38 = arith.constant 0 : index
      %c0_39 = arith.constant 0 : index
      %53 = vector.load %arg13[%c0_38, %c0_39] : memref<32x32xf32, #tpu.memory_space<vmem>>, vector<32x32xf32>
      %cst_40 = arith.constant dense<0.000000e+00> : vector<16x32xf32>
      %54 = tpu.matmul %52, %53, %cst_40 {dimension_numbers = #tpu.dot_dimension_numbers<[1], [0], [0], [1], [0, 0, 1, 1], [], []>} : vector<16x32xf32>, vector<32x32xf32>, vector<16x32xf32> -> vector<16x32xf32>
      %c0_41 = arith.constant 0 : index
      %c0_42 = arith.constant 0 : index
      %55 = vector.load %arg14[%c0_41, %c0_42] : memref<1x32xf32, #tpu.memory_space<vmem>>, vector<1x32xf32>
      %56 = vector.broadcast %55 : vector<1x32xf32> to vector<16x32xf32>
      %57 = arith.addf %54, %56 : vector<16x32xf32>
      %cst_43 = arith.constant dense<0.000000e+00> : vector<16xf32>
      %58 = vector.multi_reduction <add>, %57, %cst_43 [1] : vector<16x32xf32> to vector<16xf32>
      %59 = vector.shape_cast %58 : vector<16xf32> to vector<16x1xf32>
      %cst_44 = arith.constant 3.200000e+01 : f32
      %60 = vector.broadcast %cst_44 : f32 to vector<16x1xf32>
      %61 = arith.divf %59, %60 : vector<16x1xf32>
      %62 = vector.broadcast %61 : vector<16x1xf32> to vector<16x32xf32>
      %63 = arith.subf %57, %62 : vector<16x32xf32>
      %64 = arith.mulf %63, %63 : vector<16x32xf32>
      %cst_45 = arith.constant dense<0.000000e+00> : vector<16xf32>
      %65 = vector.multi_reduction <add>, %64, %cst_45 [1] : vector<16x32xf32> to vector<16xf32>
      %66 = vector.shape_cast %65 : vector<16xf32> to vector<16x1xf32>
      %cst_46 = arith.constant 3.200000e+01 : f32
      %67 = vector.broadcast %cst_46 : f32 to vector<16x1xf32>
      %68 = arith.divf %66, %67 : vector<16x1xf32>
      %69 = vector.broadcast %61 : vector<16x1xf32> to vector<16x32xf32>
      %70 = arith.subf %57, %69 : vector<16x32xf32>
      %cst_47 = arith.constant 9.99999974E-6 : f32
      %71 = vector.broadcast %cst_47 : f32 to vector<16x1xf32>
      %72 = arith.addf %68, %71 : vector<16x1xf32>
      %73 = math.rsqrt %72 : vector<16x1xf32>
      %74 = vector.broadcast %73 : vector<16x1xf32> to vector<16x32xf32>
      %75 = arith.mulf %70, %74 : vector<16x32xf32>
      %c0_48 = arith.constant 0 : index
      %c0_49 = arith.constant 0 : index
      %76 = vector.load %arg15[%c0_48, %c0_49] : memref<1x32xf32, #tpu.memory_space<vmem>>, vector<1x32xf32>
      %77 = vector.broadcast %76 : vector<1x32xf32> to vector<16x32xf32>
      %78 = arith.mulf %75, %77 : vector<16x32xf32>
      %c0_50 = arith.constant 0 : index
      %c0_51 = arith.constant 0 : index
      %79 = vector.load %arg16[%c0_50, %c0_51] : memref<1x32xf32, #tpu.memory_space<vmem>>, vector<1x32xf32>
      %80 = vector.broadcast %79 : vector<1x32xf32> to vector<16x32xf32>
      %81 = arith.addf %78, %80 : vector<16x32xf32>
      %c0_52 = arith.constant 0 : index
      %c0_53 = arith.constant 0 : index
      %82 = vector.load %arg17[%c0_52, %c0_53] : memref<16x32xf32, #tpu.memory_space<vmem>>, vector<16x32xf32>
      tpu.vector_store %arg17[%c0_52, %c0_53], %81 {strides = array<i32>} : memref<16x32xf32, #tpu.memory_space<vmem>>, vector<16x32xf32>,
    } else {
    }
    return
  }
  func.func @transform_0(%arg0: i32, %arg1: i32) -> (i32, i32) {
    %c0_i32 = arith.constant 0 : i32
    %c0_i32_0 = arith.constant 0 : i32
    %c0_i32_1 = arith.constant 0 : i32
    return %c0_i32, %c0_i32_0 : i32, i32
  }
  func.func @transform_1(%arg0: i32, %arg1: i32) -> (i32, i32) {
    %c0_i32 = arith.constant 0 : i32
    %c0_i32_0 = arith.constant 0 : i32
    return %arg0, %c0_i32 : i32, i32
  }
  func.func @transform_2(%arg0: i32, %arg1: i32) -> (i32, i32) {
    %c0_i32 = arith.constant 0 : i32
    %c0_i32_0 = arith.constant 0 : i32
    return %arg1, %c0_i32 : i32, i32
  }
  func.func @transform_3(%arg0: i32, %arg1: i32) -> (i32, i32) {
    %c0_i32 = arith.constant 0 : i32
    %c0_i32_0 = arith.constant 0 : i32
    return %c0_i32, %arg1 : i32, i32
  }
  func.func @transform_4(%arg0: i32, %arg1: i32) -> (i32, i32) {
    %c0_i32 = arith.constant 0 : i32
    %c0_i32_0 = arith.constant 0 : i32
    %c0_i32_1 = arith.constant 0 : i32
    return %c0_i32, %c0_i32_0 : i32, i32
  }
  func.func @transform_5(%arg0: i32, %arg1: i32) -> (i32, i32) {
    %c0_i32 = arith.constant 0 : i32
    %c0_i32_0 = arith.constant 0 : i32
    %c0_i32_1 = arith.constant 0 : i32
    return %c0_i32, %c0_i32_0 : i32, i32
  }
  func.func @transform_6(%arg0: i32, %arg1: i32) -> (i32, i32) {
    %c0_i32 = arith.constant 0 : i32
    %c0_i32_0 = arith.constant 0 : i32
    %c0_i32_1 = arith.constant 0 : i32
    return %c0_i32, %c0_i32_0 : i32, i32
  }
  func.func @transform_7(%arg0: i32, %arg1: i32) -> (i32, i32) {
    %c0_i32 = arith.constant 0 : i32
    %c0_i32_0 = arith.constant 0 : i32
    %c0_i32_1 = arith.constant 0 : i32
    return %c0_i32, %c0_i32_0 : i32, i32
  }
  func.func @transform_8(%arg0: i32, %arg1: i32) -> (i32, i32) {
    %c0_i32 = arith.constant 0 : i32
    %c0_i32_0 = arith.constant 0 : i32
    %c0_i32_1 = arith.constant 0 : i32
    return %c0_i32, %c0_i32_0 : i32, i32
  }
  func.func @transform_9(%arg0: i32, %arg1: i32) -> (i32, i32) {
    %c0_i32 = arith.constant 0 : i32
    %c0_i32_0 = arith.constant 0 : i32
    %c0_i32_1 = arith.constant 0 : i32
    return %c0_i32, %c0_i32_0 : i32, i32
  }
  func.func @transform_10(%arg0: i32, %arg1: i32) -> (i32, i32) {
    %c0_i32 = arith.constant 0 : i32
    %c0_i32_0 = arith.constant 0 : i32
    %c0_i32_1 = arith.constant 0 : i32
    return %c0_i32, %c0_i32_0 : i32, i32
  }
  func.func @transform_11(%arg0: i32, %arg1: i32) -> (i32, i32) {
    %c0_i32 = arith.constant 0 : i32
    %c0_i32_0 = arith.constant 0 : i32
    %c0_i32_1 = arith.constant 0 : i32
    return %c0_i32, %c0_i32_0 : i32, i32
  }
  func.func @transform_12(%arg0: i32, %arg1: i32) -> (i32, i32) {
    %c0_i32 = arith.constant 0 : i32
    %c0_i32_0 = arith.constant 0 : i32
    %c0_i32_1 = arith.constant 0 : i32
    return %c0_i32, %c0_i32_0 : i32, i32
  }
  func.func @transform_13(%arg0: i32, %arg1: i32) -> (i32, i32) {
    %c0_i32 = arith.constant 0 : i32
    %c0_i32_0 = arith.constant 0 : i32
    %c0_i32_1 = arith.constant 0 : i32
    return %c0_i32, %c0_i32_0 : i32, i32
  }
  func.func @transform_14(%arg0: i32, %arg1: i32) -> (i32, i32) {
    %c0_i32 = arith.constant 0 : i32
    %c0_i32_0 = arith.constant 0 : i32
    %c0_i32_1 = arith.constant 0 : i32
    return %c0_i32, %c0_i32_0 : i32, i32
  }
  func.func @transform_15(%arg0: i32, %arg1: i32) -> (i32, i32) {
    %c0_i32 = arith.constant 0 : i32
    %c0_i32_0 = arith.constant 0 : i32
    return %arg0, %c0_i32 : i32, i32
  }
}

</mosaic_0001>

<llo_original>
// kernel: message_passing.1
$region0: #{message_passing.1}
  #allocation0 [shape = 'u32[]', space=smem, size = 0x4, offset = 0x4, fixed_abs, tag = 'smem constant byte address 0x4 - core index']
  #allocation1 [shape = 'u32[144,128]{1,0:T(1,128)}', space=vmem, size = 0x12000, scoped, tag = 'internal scratch']
  #allocation2 [shape = 'f32[16,32]{1,0:T(8,128)}', space=vmem, size = 0x2000, scoped, tag = 'scratch operand']
  %s0 = inlined_call_operand.vmem [shape: f32[16,32], index: 0, kind: input, shape index: {}, may-alias: {0,1}]
  %s1 = inlined_call_operand.vmem [shape: f32[16,32], index: 1, kind: input, shape index: {}, may-alias: {0,1}]
  %s2 = inlined_call_operand.vmem [shape: s32[128,1], index: 2, kind: input, shape index: {}]
  %s3 = inlined_call_operand.vmem [shape: s32[1,128], index: 3, kind: input, shape index: {}]
  %s4 = inlined_call_operand.vmem [shape: f32[32,32], index: 4, kind: input, shape index: {}]
  %s5 = inlined_call_operand.vmem [shape: f32[32,32], index: 5, kind: input, shape index: {}]
  %s6 = inlined_call_operand.vmem [shape: f32[1,32], index: 6, kind: input, shape index: {}]
  %s7 = inlined_call_operand.vmem [shape: f32[32,32], index: 7, kind: input, shape index: {}]
  %s8 = inlined_call_operand.vmem [shape: f32[1,32], index: 8, kind: input, shape index: {}]
  %s9 = inlined_call_operand.vmem [shape: f32[32,32], index: 9, kind: input, shape index: {}]
  %s10 = inlined_call_operand.vmem [shape: f32[1,32], index: 10, kind: input, shape index: {}]
  %s11 = inlined_call_operand.vmem [shape: f32[32,32], index: 11, kind: input, shape index: {}]
  %s12 = inlined_call_operand.vmem [shape: f32[1,32], index: 12, kind: input, shape index: {}]
  %s13 = inlined_call_operand.vmem [shape: f32[1,32], index: 13, kind: input, shape index: {}]
  %s14 = inlined_call_operand.vmem [shape: f32[1,32], index: 14, kind: input, shape index: {}]
  %s15 = inlined_call_operand.hbm [shape: f32[16,32], index: 15, kind: output, shape index: {}]
  %s16 = sld [smem:[#allocation0]]
  $region78: #{message_passing.1} parent=0
    _
  %s18 = ssub.s32 1, %s16
  %s19 = scalar_select 0, %s18, %s16
  $region1: #{message_passing.1} parent=0
    #allocation3 [shape = 'u8[8192]{0}', space=vmem, size = 0x2000, scoped, tag = 'output window, operand 0, single buffered']
    #allocation4 [shape = 's32[1]{0}', space=sflag, size = 0x4, scoped, tag = 'scoped memory for message_passing.1']
    %20 = vsyncpa [#allocation4], 0
    // Predicated region
    $region2: #{message_passing.1} parent=1 // pred_check
      _
    $region3: #{message_passing.1} parent=1 // pred_check_branch
      %22 = sbr.rel (0) target = $region5
    $region4: #{message_passing.1} parent=1 // pred_region
      _
    $region5: #{message_passing.1} parent=1 // pred_fallthru
      _
    // Predicated region
    $region6: #{message_passing.1} parent=1 // pred_check
      _
    $region7: #{message_passing.1} parent=1 // pred_check_branch
      %24 = sbr.rel (0) target = $region9
    $region8: #{message_passing.1} parent=1 // pred_region
      _
    $region9: #{message_passing.1} parent=1 // pred_fallthru
      _
    // Predicated region
    $region10: #{message_passing.1} parent=1 // pred_check
      _
    $region11: #{message_passing.1} parent=1 // pred_check_branch
      %26 = sbr.rel (0) target = $region13
    $region12: #{message_passing.1} parent=1 // pred_region
      _
    $region13: #{message_passing.1} parent=1 // pred_fallthru
      _
    // Predicated region
    $region14: #{message_passing.1} parent=1 // pred_check
      _
    $region15: #{message_passing.1} parent=1 // pred_check_branch
      %28 = sbr.rel (0) target = $region17
    $region16: #{message_passing.1} parent=1 // pred_region
      _
    $region17: #{message_passing.1} parent=1 // pred_fallthru
      _
    // Predicated region
    $region18: #{message_passing.1} parent=1 // pred_check
      _
    $region19: #{message_passing.1} parent=1 // pred_check_branch
      %30 = sbr.rel (0) target = $region21
    $region20: #{message_passing.1} parent=1 // pred_region
      _
    $region21: #{message_passing.1} parent=1 // pred_fallthru
      _
    // Predicated region
    $region22: #{message_passing.1} parent=1 // pred_check
      _
    $region23: #{message_passing.1} parent=1 // pred_check_branch
      %32 = sbr.rel (0) target = $region25
    $region24: #{message_passing.1} parent=1 // pred_region
      _
    $region25: #{message_passing.1} parent=1 // pred_fallthru
      _
    // Predicated region
    $region26: #{message_passing.1} parent=1 // pred_check
      _
    $region27: #{message_passing.1} parent=1 // pred_check_branch
      %34 = sbr.rel (0) target = $region29
    $region28: #{message_passing.1} parent=1 // pred_region
      _
    $region29: #{message_passing.1} parent=1 // pred_fallthru
      _
    // Predicated region
    $region30: #{message_passing.1} parent=1 // pred_check
      _
    $region31: #{message_passing.1} parent=1 // pred_check_branch
      %36 = sbr.rel (0) target = $region33
    $region32: #{message_passing.1} parent=1 // pred_region
      _
    $region33: #{message_passing.1} parent=1 // pred_fallthru
      _
    // Predicated region
    $region34: #{message_passing.1} parent=1 // pred_check
      _
    $region35: #{message_passing.1} parent=1 // pred_check_branch
      %38 = sbr.rel (0) target = $region37
    $region36: #{message_passing.1} parent=1 // pred_region
      _
    $region37: #{message_passing.1} parent=1 // pred_fallthru
      _
    // Predicated region
    $region38: #{message_passing.1} parent=1 // pred_check
      _
    $region39: #{message_passing.1} parent=1 // pred_check_branch
      %40 = sbr.rel (0) target = $region41
    $region40: #{message_passing.1} parent=1 // pred_region
      _
    $region41: #{message_passing.1} parent=1 // pred_fallthru
      _
    // Predicated region
    $region42: #{message_passing.1} parent=1 // pred_check
      _
    $region43: #{message_passing.1} parent=1 // pred_check_branch
      %42 = sbr.rel (0) target = $region45
    $region44: #{message_passing.1} parent=1 // pred_region
      _
    $region45: #{message_passing.1} parent=1 // pred_fallthru
      _
    // Predicated region
    $region46: #{message_passing.1} parent=1 // pred_check
      _
    $region47: #{message_passing.1} parent=1 // pred_check_branch
      %44 = sbr.rel (0) target = $region49
    $region48: #{message_passing.1} parent=1 // pred_region
      _
    $region49: #{message_passing.1} parent=1 // pred_fallthru
      _
    // Predicated region
    $region50: #{message_passing.1} parent=1 // pred_check
      _
    $region51: #{message_passing.1} parent=1 // pred_check_branch
      %46 = sbr.rel (0) target = $region53
    $region52: #{message_passing.1} parent=1 // pred_region
      _
    $region53: #{message_passing.1} parent=1 // pred_fallthru
      _
    // Predicated region
    $region54: #{message_passing.1} parent=1 // pred_check
      _
    $region55: #{message_passing.1} parent=1 // pred_check_branch
      %48 = sbr.rel (0) target = $region57
    $region56: #{message_passing.1} parent=1 // pred_region
      _
    $region57: #{message_passing.1} parent=1 // pred_fallthru
      _
    // Predicated region
    $region58: #{message_passing.1} parent=1 // pred_check
      _
    $region59: #{message_passing.1} parent=1 // pred_check_branch
      %50 = sbr.rel (0) target = $region61
    $region60: #{message_passing.1} parent=1 // pred_region
      _
    $region61: #{message_passing.1} parent=1 // pred_fallthru
      _
    %p51 = scmp.eq.s32.totalorder 0, 0
    // Predicated region
    $region62: #{message_passing.1} parent=1 // pred_check
      %p52 = pneg %p51
    $region63: #{message_passing.1} parent=1 // pred_check_branch
      %54 = sbr.rel (%p52) target = $region65
    $region64: #{message_passing.1} parent=1 // pred_region
      %vm55 = vcmask 261120
      %56 = vst.msk [vmem:[#allocation2] sm:$0xff] %vm55, 0.0
      %57 = vst.msk [vmem:[#allocation2 + $0x8] sm:$0xff] %vm55, 0.0
    $region65: #{message_passing.1} parent=1 // pred_fallthru
      _
    %v58 = vld [vmem:[%s2] sm:$0xff]
    %v59 = vld [vmem:[%s2 + $0x8] sm:$0xff]
    %v60 = vld [vmem:[%s2 + $0x10] sm:$0xff]
    %v61 = vld [vmem:[%s2 + $0x18] sm:$0xff]
    %v62 = vld [vmem:[%s2 + $0x20] sm:$0xff]
    %v63 = vld [vmem:[%s2 + $0x28] sm:$0xff]
    %v64 = vld [vmem:[%s2 + $0x30] sm:$0xff]
    %v65 = vld [vmem:[%s2 + $0x38] sm:$0xff]
    %v66 = vld [vmem:[%s2 + $0x40] sm:$0xff]
    %v67 = vld [vmem:[%s2 + $0x48] sm:$0xff]
    %v68 = vld [vmem:[%s2 + $0x50] sm:$0xff]
    %v69 = vld [vmem:[%s2 + $0x58] sm:$0xff]
    %v70 = vld [vmem:[%s2 + $0x60] sm:$0xff]
    %v71 = vld [vmem:[%s2 + $0x68] sm:$0xff]
    %v72 = vld [vmem:[%s2 + $0x70] sm:$0xff]
    %v73 = vld [vmem:[%s2 + $0x78] sm:$0xff]
    %v74 = vld [vmem:[%s3] sm:$0x1]
    %v75 = vlaneseq
    %v76 = vand.u32 %v75, 127
    %77 = vset.pattern.permute.xlu0 0
    %78 = vperm.xlu0 %77, %v58
    %v79 = vpop.permute.xlu0 %78
    %80 = vset.pattern.permute.xlu0 0
    %81 = vperm.xlu0 %80, %v59
    %v82 = vpop.permute.xlu0 %81
    %83 = vset.pattern.permute.xlu0 0
    %84 = vperm.xlu0 %83, %v60
    %v85 = vpop.permute.xlu0 %84
    %86 = vset.pattern.permute.xlu0 0
    %87 = vperm.xlu0 %86, %v61
    %v88 = vpop.permute.xlu0 %87
    %89 = vset.pattern.permute.xlu0 0
    %90 = vperm.xlu0 %89, %v62
    %v91 = vpop.permute.xlu0 %90
    %92 = vset.pattern.permute.xlu0 0
    %93 = vperm.xlu0 %92, %v63
    %v94 = vpop.permute.xlu0 %93
    %95 = vset.pattern.permute.xlu0 0
    %96 = vperm.xlu0 %95, %v64
    %v97 = vpop.permute.xlu0 %96
    %98 = vset.pattern.permute.xlu0 0
    %99 = vperm.xlu0 %98, %v65
    %v100 = vpop.permute.xlu0 %99
    %101 = vset.pattern.permute.xlu0 0
    %102 = vperm.xlu0 %101, %v66
    %v103 = vpop.permute.xlu0 %102
    %104 = vset.pattern.permute.xlu0 0
    %105 = vperm.xlu0 %104, %v67
    %v106 = vpop.permute.xlu0 %105
    %107 = vset.pattern.permute.xlu0 0
    %108 = vperm.xlu0 %107, %v68
    %v109 = vpop.permute.xlu0 %108
    %110 = vset.pattern.permute.xlu0 0
    %111 = vperm.xlu0 %110, %v69
    %v112 = vpop.permute.xlu0 %111
    %113 = vset.pattern.permute.xlu0 0
    %114 = vperm.xlu0 %113, %v70
    %v115 = vpop.permute.xlu0 %114
    %116 = vset.pattern.permute.xlu0 0
    %117 = vperm.xlu0 %116, %v71
    %v118 = vpop.permute.xlu0 %117
    %119 = vset.pattern.permute.xlu0 0
    %120 = vperm.xlu0 %119, %v72
    %v121 = vpop.permute.xlu0 %120
    %122 = vset.pattern.permute.xlu0 0
    %123 = vperm.xlu0 %122, %v73
    %v124 = vpop.permute.xlu0 %123
    %vm125 = vcmp.eq.s32.totalorder %v76, %v79
    %vm126 = vcmp.eq.s32.totalorder %v76, %v82
    %vm127 = vcmp.eq.s32.totalorder %v76, %v85
    %vm128 = vcmp.eq.s32.totalorder %v76, %v88
    %vm129 = vcmp.eq.s32.totalorder %v76, %v91
    %vm130 = vcmp.eq.s32.totalorder %v76, %v94
    %vm131 = vcmp.eq.s32.totalorder %v76, %v97
    %vm132 = vcmp.eq.s32.totalorder %v76, %v100
    %vm133 = vcmp.eq.s32.totalorder %v76, %v103
    %vm134 = vcmp.eq.s32.totalorder %v76, %v106
    %vm135 = vcmp.eq.s32.totalorder %v76, %v109
    %vm136 = vcmp.eq.s32.totalorder %v76, %v112
    %vm137 = vcmp.eq.s32.totalorder %v76, %v115
    %vm138 = vcmp.eq.s32.totalorder %v76, %v118
    %vm139 = vcmp.eq.s32.totalorder %v76, %v121
    %vm140 = vcmp.eq.s32.totalorder %v76, %v124
    %v141 = vsel %vm125, 1, 0
    %v142 = vsel %vm126, 1, 0
    %v143 = vsel %vm127, 1, 0
    %v144 = vsel %vm128, 1, 0
    %v145 = vsel %vm129, 1, 0
    %v146 = vsel %vm130, 1, 0
    %v147 = vsel %vm131, 1, 0
    %v148 = vsel %vm132, 1, 0
    %v149 = vsel %vm133, 1, 0
    %v150 = vsel %vm134, 1, 0
    %v151 = vsel %vm135, 1, 0
    %v152 = vsel %vm136, 1, 0
    %v153 = vsel %vm137, 1, 0
    %v154 = vsel %vm138, 1, 0
    %v155 = vsel %vm139, 1, 0
    %v156 = vsel %vm140, 1, 0
    %v157 = vcvt.s32.f32 %v141
    %v158 = vcvt.s32.f32 %v142
    %v159 = vcvt.s32.f32 %v143
    %v160 = vcvt.s32.f32 %v144
    %v161 = vcvt.s32.f32 %v145
    %v162 = vcvt.s32.f32 %v146
    %v163 = vcvt.s32.f32 %v147
    %v164 = vcvt.s32.f32 %v148
    %v165 = vcvt.s32.f32 %v149
    %v166 = vcvt.s32.f32 %v150
    %v167 = vcvt.s32.f32 %v151
    %v168 = vcvt.s32.f32 %v152
    %v169 = vcvt.s32.f32 %v153
    %v170 = vcvt.s32.f32 %v154
    %v171 = vcvt.s32.f32 %v155
    %v172 = vcvt.s32.f32 %v156
    %v173 = vld [vmem:[%s0] sm:$0xff]
    %v174 = vld [vmem:[%s0 + $0x8] sm:$0xff]
    %vm175 = vcmask 130048
    %v177 = vsel %vm175, %v157, 0
    %v180 = vsel %vm175, %v158, 0
    %v183 = vsel %vm175, %v159, 0
    %v186 = vsel %vm175, %v160, 0
    %v189 = vsel %vm175, %v161, 0
    %v192 = vsel %vm175, %v162, 0
    %v195 = vsel %vm175, %v163, 0
    %v198 = vsel %vm175, %v164, 0
    %v201 = vsel %vm175, %v165, 0
    %v204 = vsel %vm175, %v166, 0
    %v207 = vsel %vm175, %v167, 0
    %v210 = vsel %vm175, %v168, 0
    %v213 = vsel %vm175, %v169, 0
    %v216 = vsel %vm175, %v170, 0
    %v219 = vsel %vm175, %v171, 0
    %v222 = vsel %vm175, %v172, 0
    %224 = vmatprep.subr.mxu0 0.0
    %225 = vmatpush1.msra.mxu0 0.0
    %226 = vmatprep.subr.mxu0 0.0
    %227 = vmatpush1.msra.mxu0 0.0
    %228 = vmatprep.subr.mxu0 0.0
    %229 = vmatpush1.msra.mxu0 0.0
    %230 = vmatprep.subr.mxu0 0.0
    %231 = vmatpush1.msra.mxu0 0.0
    %232 = vmatprep.subr.mxu0 0.0
    %233 = vmatpush1.msra.mxu0 0.0
    %234 = vmatprep.subr.mxu0 0.0
    %235 = vmatpush1.msra.mxu0 0.0
    %236 = vmatprep.subr.mxu0 0.0
    %237 = vmatpush1.msra.mxu0 0.0
    %238 = vmatprep.subr.mxu0 0.0
    %239 = vmatpush1.msra.mxu0 0.0
    %240 = vmatprep.subr.mxu0 0.0
    %241 = vmatpush1.msra.mxu0 0.0
    %242 = vmatprep.subr.mxu0 0.0
    %243 = vmatpush1.msra.mxu0 0.0
    %244 = vmatprep.subr.mxu0 0.0
    %245 = vmatpush1.msra.mxu0 0.0
    %246 = vmatprep.subr.mxu0 0.0
    %247 = vmatpush1.msra.mxu0 0.0
    %248 = vmatprep.subr.mxu0 0.0
    %249 = vmatpush1.msra.mxu0 0.0
    %250 = vmatprep.subr.mxu0 0.0
    %251 = vmatpush1.msra.mxu0 0.0
    %252 = vmatprep.subr.mxu0 0.0
    %253 = vmatpush1.msra.mxu0 %v174
    %254 = vmatprep.subr.mxu0 0.0
    %255 = vmatpush1.msra.mxu0 %v173
    %256 = vmatprep.subr.mxu0 0.0
    %257 = vmatpush2.msra.mxu0 0.0
    %258 = vmatprep.subr.mxu0 0.0
    %259 = vmatpush2.msra.mxu0 0.0
    %260 = vmatprep.subr.mxu0 0.0
    %261 = vmatpush2.msra.mxu0 0.0
    %262 = vmatprep.subr.mxu0 0.0
    %263 = vmatpush2.msra.mxu0 0.0
    %264 = vmatprep.subr.mxu0 0.0
    %265 = vmatpush2.msra.mxu0 0.0
    %266 = vmatprep.subr.mxu0 0.0
    %267 = vmatpush2.msra.mxu0 0.0
    %268 = vmatprep.subr.mxu0 0.0
    %269 = vmatpush2.msra.mxu0 0.0
    %270 = vmatprep.subr.mxu0 0.0
    %271 = vmatpush2.msra.mxu0 0.0
    %272 = vmatprep.subr.mxu0 0.0
    %273 = vmatpush2.msra.mxu0 0.0
    %274 = vmatprep.subr.mxu0 0.0
    %275 = vmatpush2.msra.mxu0 0.0
    %276 = vmatprep.subr.mxu0 0.0
    %277 = vmatpush2.msra.mxu0 0.0
    %278 = vmatprep.subr.mxu0 0.0
    %279 = vmatpush2.msra.mxu0 0.0
    %280 = vmatprep.subr.mxu0 0.0
    %281 = vmatpush2.msra.mxu0 0.0
    %282 = vmatprep.subr.mxu0 0.0
    %283 = vmatpush2.msra.mxu0 0.0
    %284 = vmatprep.subr.mxu0 0.0
    %285 = vmatpush2.msra.mxu0 0.0
    %286 = vmatprep.subr.mxu0 0.0
    %287 = vmatpush2.msra.mxu0 0.0
    %288 = vmatprep.mubr.f32.mxu0 0.0
    %289 = vmatmul.mubr.f32.gmra.mxu0 %v177
    %v290 = vpop.f32.mrf.mxu0
    %v291 = vadd.f32 0.0, %v290
    %v292 = vpop.f32.mrf.mxu0
    %293 = vmatprep.mubr.f32.mxu0 0.0
    %294 = vmatmul.mubr.f32.gmra.mxu0 %v180
    %v295 = vpop.f32.mrf.mxu0
    %v296 = vadd.f32 0.0, %v295
    %v297 = vpop.f32.mrf.mxu0
    %298 = vmatprep.mubr.f32.mxu0 0.0
    %299 = vmatmul.mubr.f32.gmra.mxu0 %v183
    %v300 = vpop.f32.mrf.mxu0
    %v301 = vadd.f32 0.0, %v300
    %v302 = vpop.f32.mrf.mxu0
    %303 = vmatprep.mubr.f32.mxu0 0.0
    %304 = vmatmul.mubr.f32.gmra.mxu0 %v186
    %v305 = vpop.f32.mrf.mxu0
    %v306 = vadd.f32 0.0, %v305
    %v307 = vpop.f32.mrf.mxu0
    %308 = vmatprep.mubr.f32.mxu0 0.0
    %309 = vmatmul.mubr.f32.gmra.mxu0 %v189
    %v310 = vpop.f32.mrf.mxu0
    %v311 = vadd.f32 0.0, %v310
    %v312 = vpop.f32.mrf.mxu0
    %313 = vmatprep.mubr.f32.mxu0 0.0
    %314 = vmatmul.mubr.f32.gmra.mxu0 %v192
    %v315 = vpop.f32.mrf.mxu0
    %v316 = vadd.f32 0.0, %v315
    %v317 = vpop.f32.mrf.mxu0
    %318 = vmatprep.mubr.f32.mxu0 0.0
    %319 = vmatmul.mubr.f32.gmra.mxu0 %v195
    %v320 = vpop.f32.mrf.mxu0
    %v321 = vadd.f32 0.0, %v320
    %v322 = vpop.f32.mrf.mxu0
    %323 = vmatprep.mubr.f32.mxu0 0.0
    %324 = vmatmul.mubr.f32.gmra.mxu0 %v198
    %v325 = vpop.f32.mrf.mxu0
    %v326 = vadd.f32 0.0, %v325
    %v327 = vpop.f32.mrf.mxu0
    %328 = vmatprep.mubr.f32.mxu0 0.0
    %329 = vmatmul.mubr.f32.gmra.mxu0 %v201
    %v330 = vpop.f32.mrf.mxu0
    %v331 = vadd.f32 0.0, %v330
    %v332 = vpop.f32.mrf.mxu0
    %333 = vmatprep.mubr.f32.mxu0 0.0
    %334 = vmatmul.mubr.f32.gmra.mxu0 %v204
    %v335 = vpop.f32.mrf.mxu0
    %v336 = vadd.f32 0.0, %v335
    %v337 = vpop.f32.mrf.mxu0
    %338 = vmatprep.mubr.f32.mxu0 0.0
    %339 = vmatmul.mubr.f32.gmra.mxu0 %v207
    %v340 = vpop.f32.mrf.mxu0
    %v341 = vadd.f32 0.0, %v340
    %v342 = vpop.f32.mrf.mxu0
    %343 = vmatprep.mubr.f32.mxu0 0.0
    %344 = vmatmul.mubr.f32.gmra.mxu0 %v210
    %v345 = vpop.f32.mrf.mxu0
    %v346 = vadd.f32 0.0, %v345
    %v347 = vpop.f32.mrf.mxu0
    %348 = vmatprep.mubr.f32.mxu0 0.0
    %349 = vmatmul.mubr.f32.gmra.mxu0 %v213
    %v350 = vpop.f32.mrf.mxu0
    %v351 = vadd.f32 0.0, %v350
    %v352 = vpop.f32.mrf.mxu0
    %353 = vmatprep.mubr.f32.mxu0 0.0
    %354 = vmatmul.mubr.f32.gmra.mxu0 %v216
    %v355 = vpop.f32.mrf.mxu0
    %v356 = vadd.f32 0.0, %v355
    %v357 = vpop.f32.mrf.mxu0
    %358 = vmatprep.mubr.f32.mxu0 0.0
    %359 = vmatmul.mubr.f32.gmra.mxu0 %v219
    %v360 = vpop.f32.mrf.mxu0
    %v361 = vadd.f32 0.0, %v360
    %v362 = vpop.f32.mrf.mxu0
    %363 = vmatprep.mubr.f32.mxu0 0.0
    %364 = vmatmul.mubr.f32.gmra.mxu0 %v222
    %v365 = vpop.f32.mrf.mxu0
    %v366 = vadd.f32 0.0, %v365
    %v367 = vpop.f32.mrf.mxu0
    %368 = vdwg.mxu0
    %v369 = vlaneseq
    %v370 = vshrl.u32 %v369, 7
    %v371 = vadd.s32 %v370, 8
    %s372 = smul.u32 0, 16
    %v373 = vstv %s372
    %v374 = vadd.s32 %v370, %v373
    %v375 = vadd.s32 %v371, %v373
    %v376 = vlaneseq
    %v377 = vshrl.u32 %v376, 7
    %v378 = vsub.s32 0, %v377
    %v379 = vrot.slane %v74, %v378
    %vm380 = vcmp.eq.s32.totalorder %v374, %v379
    %vm381 = vcmp.eq.s32.totalorder %v375, %v379
    %v382 = vsel %vm380, 1, 0
    %v383 = vsel %vm381, 1, 0
    %v384 = vcvt.s32.f32 %v382
    %v385 = vcvt.s32.f32 %v383
    %v386 = vld [vmem:[#allocation2] sm:$0xff]
    %v387 = vld [vmem:[#allocation2 + $0x8] sm:$0xff]
    %388 = vmatprep.subr.mxu0 0.0
    %389 = vmatpush1.msra.mxu0 %v366
    %390 = vmatprep.subr.mxu0 0.0
    %391 = vmatpush1.msra.mxu0 %v361
    %392 = vmatprep.subr.mxu0 0.0
    %393 = vmatpush1.msra.mxu0 %v356
    %394 = vmatprep.subr.mxu0 0.0
    %395 = vmatpush1.msra.mxu0 %v351
    %396 = vmatprep.subr.mxu0 0.0
    %397 = vmatpush1.msra.mxu0 %v346
    %398 = vmatprep.subr.mxu0 0.0
    %399 = vmatpush1.msra.mxu0 %v341
    %400 = vmatprep.subr.mxu0 0.0
    %401 = vmatpush1.msra.mxu0 %v336
    %402 = vmatprep.subr.mxu0 0.0
    %403 = vmatpush1.msra.mxu0 %v331
    %404 = vmatprep.subr.mxu0 0.0
    %405 = vmatpush1.msra.mxu0 %v326
    %406 = vmatprep.subr.mxu0 0.0
    %407 = vmatpush1.msra.mxu0 %v321
    %408 = vmatprep.subr.mxu0 0.0
    %409 = vmatpush1.msra.mxu0 %v316
    %410 = vmatprep.subr.mxu0 0.0
    %411 = vmatpush1.msra.mxu0 %v311
    %412 = vmatprep.subr.mxu0 0.0
    %413 = vmatpush1.msra.mxu0 %v306
    %414 = vmatprep.subr.mxu0 0.0
    %415 = vmatpush1.msra.mxu0 %v301
    %416 = vmatprep.subr.mxu0 0.0
    %417 = vmatpush1.msra.mxu0 %v296
    %418 = vmatprep.subr.mxu0 0.0
    %419 = vmatpush1.msra.mxu0 %v291
    %420 = vmatprep.subr.mxu0 0.0
    %421 = vmatpush2.msra.mxu0 0.0
    %422 = vmatprep.subr.mxu0 0.0
    %423 = vmatpush2.msra.mxu0 0.0
    %424 = vmatprep.subr.mxu0 0.0
    %425 = vmatpush2.msra.mxu0 0.0
    %426 = vmatprep.subr.mxu0 0.0
    %427 = vmatpush2.msra.mxu0 0.0
    %428 = vmatprep.subr.mxu0 0.0
    %429 = vmatpush2.msra.mxu0 0.0
    %430 = vmatprep.subr.mxu0 0.0
    %431 = vmatpush2.msra.mxu0 0.0
    %432 = vmatprep.subr.mxu0 0.0
    %433 = vmatpush2.msra.mxu0 0.0
    %434 = vmatprep.subr.mxu0 0.0
    %435 = vmatpush2.msra.mxu0 0.0
    %436 = vmatprep.subr.mxu0 0.0
    %437 = vmatpush2.msra.mxu0 0.0
    %438 = vmatprep.subr.mxu0 0.0
    %439 = vmatpush2.msra.mxu0 0.0
    %440 = vmatprep.subr.mxu0 0.0
    %441 = vmatpush2.msra.mxu0 0.0
    %442 = vmatprep.subr.mxu0 0.0
    %443 = vmatpush2.msra.mxu0 0.0
    %444 = vmatprep.subr.mxu0 0.0
    %445 = vmatpush2.msra.mxu0 0.0
    %446 = vmatprep.subr.mxu0 0.0
    %447 = vmatpush2.msra.mxu0 0.0
    %448 = vmatprep.subr.mxu0 0.0
    %449 = vmatpush2.msra.mxu0 0.0
    %450 = vmatprep.subr.mxu0 0.0
    %451 = vmatpush2.msra.mxu0 0.0
    %452 = vmatprep.mubr.f32.mxu0 0.0
    %453 = vmatmul.mubr.f32.gmra.mxu0 %v384
    %v454 = vpop.f32.mrf.mxu0
    %v455 = vadd.f32 0.0, %v454
    %v456 = vpop.f32.mrf.mxu0
    %457 = vmatprep.mubr.f32.mxu0 0.0
    %458 = vmatmul.mubr.f32.gmra.mxu0 %v385
    %v459 = vpop.f32.mrf.mxu0
    %v460 = vadd.f32 0.0, %v459
    %v461 = vpop.f32.mrf.mxu0
    %462 = vdwg.mxu0
    %v463 = vadd.f32 %v386, %v455
    %v464 = vadd.f32 %v387, %v460
    %vm465 = vcmask 261120
    %466 = vst.msk [vmem:[#allocation2] sm:$0xff] %vm465, %v463
    %467 = vst.msk [vmem:[#allocation2 + $0x8] sm:$0xff] %vm465, %v464
    // Predicated region
    $region66: #{message_passing.1} parent=1 // pred_check
      %p468 = pneg %p51
    $region67: #{message_passing.1} parent=1 // pred_check_branch
      %470 = sbr.rel (%p468) target = $region69
    $region68: #{message_passing.1} parent=1 // pred_region
      %v471 = vld [vmem:[%s1] sm:$0xff]
      %v472 = vld [vmem:[%s1 + $0x8] sm:$0xff]
      %v473 = vld [vmem:[#allocation2] sm:$0xff]
      %v474 = vld [vmem:[#allocation2 + $0x8] sm:$0xff]
      %v475 = vld [vmem:[%s4] sm:$0xff]
      %v476 = vld [vmem:[%s4 + $0x8] sm:$0xff]
      %v477 = vld [vmem:[%s4 + $0x10] sm:$0xff]
      %v478 = vld [vmem:[%s4 + $0x18] sm:$0xff]
      %v479 = vld [vmem:[%s5] sm:$0xff]
      %v480 = vld [vmem:[%s5 + $0x8] sm:$0xff]
      %v481 = vld [vmem:[%s5 + $0x10] sm:$0xff]
      %v482 = vld [vmem:[%s5 + $0x18] sm:$0xff]
      %v484 = vsel %vm465, %v473, 0
      %v487 = vsel %vm465, %v474, 0
      %489 = vmatprep.subr.mxu0 0.0
      %490 = vmatpush1.msra.mxu0 0.0
      %491 = vmatprep.subr.mxu0 0.0
      %492 = vmatpush1.msra.mxu0 0.0
      %493 = vmatprep.subr.mxu0 0.0
      %494 = vmatpush1.msra.mxu0 0.0
      %495 = vmatprep.subr.mxu0 0.0
      %496 = vmatpush1.msra.mxu0 0.0
      %497 = vmatprep.subr.mxu0 0.0
      %498 = vmatpush1.msra.mxu0 0.0
      %499 = vmatprep.subr.mxu0 0.0
      %500 = vmatpush1.msra.mxu0 0.0
      %501 = vmatprep.subr.mxu0 0.0
      %502 = vmatpush1.msra.mxu0 0.0
      %503 = vmatprep.subr.mxu0 0.0
      %504 = vmatpush1.msra.mxu0 0.0
      %505 = vmatprep.subr.mxu0 0.0
      %506 = vmatpush1.msra.mxu0 0.0
      %507 = vmatprep.subr.mxu0 0.0
      %508 = vmatpush1.msra.mxu0 0.0
      %509 = vmatprep.subr.mxu0 0.0
      %510 = vmatpush1.msra.mxu0 0.0
      %511 = vmatprep.subr.mxu0 0.0
      %512 = vmatpush1.msra.mxu0 0.0
      %513 = vmatprep.subr.mxu0 0.0
      %514 = vmatpush1.msra.mxu0 %v482
      %515 = vmatprep.subr.mxu0 0.0
      %516 = vmatpush1.msra.mxu0 %v481
      %517 = vmatprep.subr.mxu0 0.0
      %518 = vmatpush1.msra.mxu0 %v480
      %519 = vmatprep.subr.mxu0 0.0
      %520 = vmatpush1.msra.mxu0 %v479
      %521 = vmatprep.subr.mxu0 0.0
      %522 = vmatpush2.msra.mxu0 0.0
      %523 = vmatprep.subr.mxu0 0.0
      %524 = vmatpush2.msra.mxu0 0.0
      %525 = vmatprep.subr.mxu0 0.0
      %526 = vmatpush2.msra.mxu0 0.0
      %527 = vmatprep.subr.mxu0 0.0
      %528 = vmatpush2.msra.mxu0 0.0
      %529 = vmatprep.subr.mxu0 0.0
      %530 = vmatpush2.msra.mxu0 0.0
      %531 = vmatprep.subr.mxu0 0.0
      %532 = vmatpush2.msra.mxu0 0.0
      %533 = vmatprep.subr.mxu0 0.0
      %534 = vmatpush2.msra.mxu0 0.0
      %535 = vmatprep.subr.mxu0 0.0
      %536 = vmatpush2.msra.mxu0 0.0
      %537 = vmatprep.subr.mxu0 0.0
      %538 = vmatpush2.msra.mxu0 0.0
      %539 = vmatprep.subr.mxu0 0.0
      %540 = vmatpush2.msra.mxu0 0.0
      %541 = vmatprep.subr.mxu0 0.0
      %542 = vmatpush2.msra.mxu0 0.0
      %543 = vmatprep.subr.mxu0 0.0
      %544 = vmatpush2.msra.mxu0 0.0
      %545 = vmatprep.subr.mxu0 0.0
      %546 = vmatpush2.msra.mxu0 0.0
      %547 = vmatprep.subr.mxu0 0.0
      %548 = vmatpush2.msra.mxu0 0.0
      %549 = vmatprep.subr.mxu0 0.0
      %550 = vmatpush2.msra.mxu0 0.0
      %551 = vmatprep.subr.mxu0 0.0
      %552 = vmatpush2.msra.mxu0 0.0
      %553 = vmatprep.mubr.f32.mxu0 0.0
      %554 = vmatmul.mubr.f32.gmra.mxu0 %v484
      %v555 = vpop.f32.mrf.mxu0
      %v556 = vadd.f32 0.0, %v555
      %v557 = vpop.f32.mrf.mxu0
      %558 = vmatprep.mubr.f32.mxu0 0.0
      %559 = vmatmul.mubr.f32.gmra.mxu0 %v487
      %v560 = vpop.f32.mrf.mxu0
      %v561 = vadd.f32 0.0, %v560
      %v562 = vpop.f32.mrf.mxu0
      %563 = vdwg.mxu0
      %v565 = vsel %vm465, %v471, 0
      %v568 = vsel %vm465, %v472, 0
      %570 = vmatprep.subr.mxu0 0.0
      %571 = vmatpush1.msra.mxu0 0.0
      %572 = vmatprep.subr.mxu0 0.0
      %573 = vmatpush1.msra.mxu0 0.0
      %574 = vmatprep.subr.mxu0 0.0
      %575 = vmatpush1.msra.mxu0 0.0
      %576 = vmatprep.subr.mxu0 0.0
      %577 = vmatpush1.msra.mxu0 0.0
      %578 = vmatprep.subr.mxu0 0.0
      %579 = vmatpush1.msra.mxu0 0.0
      %580 = vmatprep.subr.mxu0 0.0
      %581 = vmatpush1.msra.mxu0 0.0
      %582 = vmatprep.subr.mxu0 0.0
      %583 = vmatpush1.msra.mxu0 0.0
      %584 = vmatprep.subr.mxu0 0.0
      %585 = vmatpush1.msra.mxu0 0.0
      %586 = vmatprep.subr.mxu0 0.0
      %587 = vmatpush1.msra.mxu0 0.0
      %588 = vmatprep.subr.mxu0 0.0
      %589 = vmatpush1.msra.mxu0 0.0
      %590 = vmatprep.subr.mxu0 0.0
      %591 = vmatpush1.msra.mxu0 0.0
      %592 = vmatprep.subr.mxu0 0.0
      %593 = vmatpush1.msra.mxu0 0.0
      %594 = vmatprep.subr.mxu0 0.0
      %595 = vmatpush1.msra.mxu0 %v478
      %596 = vmatprep.subr.mxu0 0.0
      %597 = vmatpush1.msra.mxu0 %v477
      %598 = vmatprep.subr.mxu0 0.0
      %599 = vmatpush1.msra.mxu0 %v476
      %600 = vmatprep.subr.mxu0 0.0
      %601 = vmatpush1.msra.mxu0 %v475
      %602 = vmatprep.subr.mxu0 0.0
      %603 = vmatpush2.msra.mxu0 0.0
      %604 = vmatprep.subr.mxu0 0.0
      %605 = vmatpush2.msra.mxu0 0.0
      %606 = vmatprep.subr.mxu0 0.0
      %607 = vmatpush2.msra.mxu0 0.0
      %608 = vmatprep.subr.mxu0 0.0
      %609 = vmatpush2.msra.mxu0 0.0
      %610 = vmatprep.subr.mxu0 0.0
      %611 = vmatpush2.msra.mxu0 0.0
      %612 = vmatprep.subr.mxu0 0.0
      %613 = vmatpush2.msra.mxu0 0.0
      %614 = vmatprep.subr.mxu0 0.0
      %615 = vmatpush2.msra.mxu0 0.0
      %616 = vmatprep.subr.mxu0 0.0
      %617 = vmatpush2.msra.mxu0 0.0
      %618 = vmatprep.subr.mxu0 0.0
      %619 = vmatpush2.msra.mxu0 0.0
      %620 = vmatprep.subr.mxu0 0.0
      %621 = vmatpush2.msra.mxu0 0.0
      %622 = vmatprep.subr.mxu0 0.0
      %623 = vmatpush2.msra.mxu0 0.0
      %624 = vmatprep.subr.mxu0 0.0
      %625 = vmatpush2.msra.mxu0 0.0
      %626 = vmatprep.subr.mxu0 0.0
      %627 = vmatpush2.msra.mxu0 0.0
      %628 = vmatprep.subr.mxu0 0.0
      %629 = vmatpush2.msra.mxu0 0.0
      %630 = vmatprep.subr.mxu0 0.0
      %631 = vmatpush2.msra.mxu0 0.0
      %632 = vmatprep.subr.mxu0 0.0
      %633 = vmatpush2.msra.mxu0 0.0
      %634 = vmatprep.mubr.f32.mxu0 0.0
      %635 = vmatmul.mubr.f32.gmra.mxu0 %v565
      %v636 = vpop.f32.mrf.mxu0
      %v637 = vadd.f32 %v556, %v636
      %v638 = vpop.f32.mrf.mxu0
      %639 = vmatprep.mubr.f32.mxu0 0.0
      %640 = vmatmul.mubr.f32.gmra.mxu0 %v568
      %v641 = vpop.f32.mrf.mxu0
      %v642 = vadd.f32 %v561, %v641
      %v643 = vpop.f32.mrf.mxu0
      %644 = vdwg.mxu0
      %v645 = vld [vmem:[%s6] sm:$0x1]
      %v647 = vlaneseq
      %v648 = vshrl.u32 %v647, 7
      %v649 = vsub.s32 0, %v648
      %v650 = vrot.slane %v645, %v649
      %v652 = vadd.f32 %v637, %v650
      %v653 = vadd.f32 %v642, %v650
      %v654 = vmax.f32 %v652, 0.0
      %v655 = vmax.f32 %v653, 0.0
      %v656 = vld [vmem:[%s7] sm:$0xff]
      %v657 = vld [vmem:[%s7 + $0x8] sm:$0xff]
      %v658 = vld [vmem:[%s7 + $0x10] sm:$0xff]
      %v659 = vld [vmem:[%s7 + $0x18] sm:$0xff]
      %v660 = vld [vmem:[%s8] sm:$0x1]
      %v662 = vlaneseq
      %v663 = vshrl.u32 %v662, 7
      %v664 = vsub.s32 0, %v663
      %v665 = vrot.slane %v660, %v664
      %v668 = vsel %vm465, %v654, 0
      %v671 = vsel %vm465, %v655, 0
      %673 = vmatprep.subr.mxu0 0.0
      %674 = vmatpush1.msra.mxu0 0.0
      %675 = vmatprep.subr.mxu0 0.0
      %676 = vmatpush1.msra.mxu0 0.0
      %677 = vmatprep.subr.mxu0 0.0
      %678 = vmatpush1.msra.mxu0 0.0
      %679 = vmatprep.subr.mxu0 0.0
      %680 = vmatpush1.msra.mxu0 0.0
      %681 = vmatprep.subr.mxu0 0.0
      %682 = vmatpush1.msra.mxu0 0.0
      %683 = vmatprep.subr.mxu0 0.0
      %684 = vmatpush1.msra.mxu0 0.0
      %685 = vmatprep.subr.mxu0 0.0
      %686 = vmatpush1.msra.mxu0 0.0
      %687 = vmatprep.subr.mxu0 0.0
      %688 = vmatpush1.msra.mxu0 0.0
      %689 = vmatprep.subr.mxu0 0.0
      %690 = vmatpush1.msra.mxu0 0.0
      %691 = vmatprep.subr.mxu0 0.0
      %692 = vmatpush1.msra.mxu0 0.0
      %693 = vmatprep.subr.mxu0 0.0
      %694 = vmatpush1.msra.mxu0 0.0
      %695 = vmatprep.subr.mxu0 0.0
      %696 = vmatpush1.msra.mxu0 0.0
      %697 = vmatprep.subr.mxu0 0.0
      %698 = vmatpush1.msra.mxu0 %v659
      %699 = vmatprep.subr.mxu0 0.0
      %700 = vmatpush1.msra.mxu0 %v658
      %701 = vmatprep.subr.mxu0 0.0
      %702 = vmatpush1.msra.mxu0 %v657
      %703 = vmatprep.subr.mxu0 0.0
      %704 = vmatpush1.msra.mxu0 %v656
      %705 = vmatprep.subr.mxu0 0.0
      %706 = vmatpush2.msra.mxu0 0.0
      %707 = vmatprep.subr.mxu0 0.0
      %708 = vmatpush2.msra.mxu0 0.0
      %709 = vmatprep.subr.mxu0 0.0
      %710 = vmatpush2.msra.mxu0 0.0
      %711 = vmatprep.subr.mxu0 0.0
      %712 = vmatpush2.msra.mxu0 0.0
      %713 = vmatprep.subr.mxu0 0.0
      %714 = vmatpush2.msra.mxu0 0.0
      %715 = vmatprep.subr.mxu0 0.0
      %716 = vmatpush2.msra.mxu0 0.0
      %717 = vmatprep.subr.mxu0 0.0
      %718 = vmatpush2.msra.mxu0 0.0
      %719 = vmatprep.subr.mxu0 0.0
      %720 = vmatpush2.msra.mxu0 0.0
      %721 = vmatprep.subr.mxu0 0.0
      %722 = vmatpush2.msra.mxu0 0.0
      %723 = vmatprep.subr.mxu0 0.0
      %724 = vmatpush2.msra.mxu0 0.0
      %725 = vmatprep.subr.mxu0 0.0
      %726 = vmatpush2.msra.mxu0 0.0
      %727 = vmatprep.subr.mxu0 0.0
      %728 = vmatpush2.msra.mxu0 0.0
      %729 = vmatprep.subr.mxu0 0.0
      %730 = vmatpush2.msra.mxu0 0.0
      %731 = vmatprep.subr.mxu0 0.0
      %732 = vmatpush2.msra.mxu0 0.0
      %733 = vmatprep.subr.mxu0 0.0
      %734 = vmatpush2.msra.mxu0 0.0
      %735 = vmatprep.subr.mxu0 0.0
      %736 = vmatpush2.msra.mxu0 0.0
      %737 = vmatprep.mubr.f32.mxu0 0.0
      %738 = vmatmul.mubr.f32.gmra.mxu0 %v668
      %v739 = vpop.f32.mrf.mxu0
      %v740 = vadd.f32 %v665, %v739
      %v741 = vpop.f32.mrf.mxu0
      %742 = vmatprep.mubr.f32.mxu0 0.0
      %743 = vmatmul.mubr.f32.gmra.mxu0 %v671
      %v744 = vpop.f32.mrf.mxu0
      %v745 = vadd.f32 %v665, %v744
      %v746 = vpop.f32.mrf.mxu0
      %747 = vdwg.mxu0
      %v748 = vmax.f32 %v740, 0.0
      %v749 = vmax.f32 %v745, 0.0
      %v750 = vld [vmem:[%s9] sm:$0xff]
      %v751 = vld [vmem:[%s9 + $0x8] sm:$0xff]
      %v752 = vld [vmem:[%s9 + $0x10] sm:$0xff]
      %v753 = vld [vmem:[%s9 + $0x18] sm:$0xff]
      %v754 = vld [vmem:[%s10] sm:$0x1]
      %v756 = vlaneseq
      %v757 = vshrl.u32 %v756, 7
      %v758 = vsub.s32 0, %v757
      %v759 = vrot.slane %v754, %v758
      %v762 = vsel %vm465, %v748, 0
      %v765 = vsel %vm465, %v749, 0
      %767 = vmatprep.subr.mxu0 0.0
      %768 = vmatpush1.msra.mxu0 0.0
      %769 = vmatprep.subr.mxu0 0.0
      %770 = vmatpush1.msra.mxu0 0.0
      %771 = vmatprep.subr.mxu0 0.0
      %772 = vmatpush1.msra.mxu0 0.0
      %773 = vmatprep.subr.mxu0 0.0
      %774 = vmatpush1.msra.mxu0 0.0
      %775 = vmatprep.subr.mxu0 0.0
      %776 = vmatpush1.msra.mxu0 0.0
      %777 = vmatprep.subr.mxu0 0.0
      %778 = vmatpush1.msra.mxu0 0.0
      %779 = vmatprep.subr.mxu0 0.0
      %780 = vmatpush1.msra.mxu0 0.0
      %781 = vmatprep.subr.mxu0 0.0
      %782 = vmatpush1.msra.mxu0 0.0
      %783 = vmatprep.subr.mxu0 0.0
      %784 = vmatpush1.msra.mxu0 0.0
      %785 = vmatprep.subr.mxu0 0.0
      %786 = vmatpush1.msra.mxu0 0.0
      %787 = vmatprep.subr.mxu0 0.0
      %788 = vmatpush1.msra.mxu0 0.0
      %789 = vmatprep.subr.mxu0 0.0
      %790 = vmatpush1.msra.mxu0 0.0
      %791 = vmatprep.subr.mxu0 0.0
      %792 = vmatpush1.msra.mxu0 %v753
      %793 = vmatprep.subr.mxu0 0.0
      %794 = vmatpush1.msra.mxu0 %v752
      %795 = vmatprep.subr.mxu0 0.0
      %796 = vmatpush1.msra.mxu0 %v751
      %797 = vmatprep.subr.mxu0 0.0
      %798 = vmatpush1.msra.mxu0 %v750
      %799 = vmatprep.subr.mxu0 0.0
      %800 = vmatpush2.msra.mxu0 0.0
      %801 = vmatprep.subr.mxu0 0.0
      %802 = vmatpush2.msra.mxu0 0.0
      %803 = vmatprep.subr.mxu0 0.0
      %804 = vmatpush2.msra.mxu0 0.0
      %805 = vmatprep.subr.mxu0 0.0
      %806 = vmatpush2.msra.mxu0 0.0
      %807 = vmatprep.subr.mxu0 0.0
      %808 = vmatpush2.msra.mxu0 0.0
      %809 = vmatprep.subr.mxu0 0.0
      %810 = vmatpush2.msra.mxu0 0.0
      %811 = vmatprep.subr.mxu0 0.0
      %812 = vmatpush2.msra.mxu0 0.0
      %813 = vmatprep.subr.mxu0 0.0
      %814 = vmatpush2.msra.mxu0 0.0
      %815 = vmatprep.subr.mxu0 0.0
      %816 = vmatpush2.msra.mxu0 0.0
      %817 = vmatprep.subr.mxu0 0.0
      %818 = vmatpush2.msra.mxu0 0.0
      %819 = vmatprep.subr.mxu0 0.0
      %820 = vmatpush2.msra.mxu0 0.0
      %821 = vmatprep.subr.mxu0 0.0
      %822 = vmatpush2.msra.mxu0 0.0
      %823 = vmatprep.subr.mxu0 0.0
      %824 = vmatpush2.msra.mxu0 0.0
      %825 = vmatprep.subr.mxu0 0.0
      %826 = vmatpush2.msra.mxu0 0.0
      %827 = vmatprep.subr.mxu0 0.0
      %828 = vmatpush2.msra.mxu0 0.0
      %829 = vmatprep.subr.mxu0 0.0
      %830 = vmatpush2.msra.mxu0 0.0
      %831 = vmatprep.mubr.f32.mxu0 0.0
      %832 = vmatmul.mubr.f32.gmra.mxu0 %v762
      %v833 = vpop.f32.mrf.mxu0
      %v834 = vadd.f32 %v759, %v833
      %v835 = vpop.f32.mrf.mxu0
      %836 = vmatprep.mubr.f32.mxu0 0.0
      %837 = vmatmul.mubr.f32.gmra.mxu0 %v765
      %v838 = vpop.f32.mrf.mxu0
      %v839 = vadd.f32 %v759, %v838
      %v840 = vpop.f32.mrf.mxu0
      %841 = vdwg.mxu0
      %v842 = vmax.f32 %v834, 0.0
      %v843 = vmax.f32 %v839, 0.0
      %v844 = vld [vmem:[%s11] sm:$0xff]
      %v845 = vld [vmem:[%s11 + $0x8] sm:$0xff]
      %v846 = vld [vmem:[%s11 + $0x10] sm:$0xff]
      %v847 = vld [vmem:[%s11 + $0x18] sm:$0xff]
      %v848 = vld [vmem:[%s12] sm:$0x1]
      %v850 = vlaneseq
      %v851 = vshrl.u32 %v850, 7
      %v852 = vsub.s32 0, %v851
      %v853 = vrot.slane %v848, %v852
      %v856 = vsel %vm465, %v842, 0
      %v859 = vsel %vm465, %v843, 0
      %861 = vmatprep.subr.mxu0 0.0
      %862 = vmatpush1.msra.mxu0 0.0
      %863 = vmatprep.subr.mxu0 0.0
      %864 = vmatpush1.msra.mxu0 0.0
      %865 = vmatprep.subr.mxu0 0.0
      %866 = vmatpush1.msra.mxu0 0.0
      %867 = vmatprep.subr.mxu0 0.0
      %868 = vmatpush1.msra.mxu0 0.0
      %869 = vmatprep.subr.mxu0 0.0
      %870 = vmatpush1.msra.mxu0 0.0
      %871 = vmatprep.subr.mxu0 0.0
      %872 = vmatpush1.msra.mxu0 0.0
      %873 = vmatprep.subr.mxu0 0.0
      %874 = vmatpush1.msra.mxu0 0.0
      %875 = vmatprep.subr.mxu0 0.0
      %876 = vmatpush1.msra.mxu0 0.0
      %877 = vmatprep.subr.mxu0 0.0
      %878 = vmatpush1.msra.mxu0 0.0
      %879 = vmatprep.subr.mxu0 0.0
      %880 = vmatpush1.msra.mxu0 0.0
      %881 = vmatprep.subr.mxu0 0.0
      %882 = vmatpush1.msra.mxu0 0.0
      %883 = vmatprep.subr.mxu0 0.0
      %884 = vmatpush1.msra.mxu0 0.0
      %885 = vmatprep.subr.mxu0 0.0
      %886 = vmatpush1.msra.mxu0 %v847
      %887 = vmatprep.subr.mxu0 0.0
      %888 = vmatpush1.msra.mxu0 %v846
      %889 = vmatprep.subr.mxu0 0.0
      %890 = vmatpush1.msra.mxu0 %v845
      %891 = vmatprep.subr.mxu0 0.0
      %892 = vmatpush1.msra.mxu0 %v844
      %893 = vmatprep.subr.mxu0 0.0
      %894 = vmatpush2.msra.mxu0 0.0
      %895 = vmatprep.subr.mxu0 0.0
      %896 = vmatpush2.msra.mxu0 0.0
      %897 = vmatprep.subr.mxu0 0.0
      %898 = vmatpush2.msra.mxu0 0.0
      %899 = vmatprep.subr.mxu0 0.0
      %900 = vmatpush2.msra.mxu0 0.0
      %901 = vmatprep.subr.mxu0 0.0
      %902 = vmatpush2.msra.mxu0 0.0
      %903 = vmatprep.subr.mxu0 0.0
      %904 = vmatpush2.msra.mxu0 0.0
      %905 = vmatprep.subr.mxu0 0.0
      %906 = vmatpush2.msra.mxu0 0.0
      %907 = vmatprep.subr.mxu0 0.0
      %908 = vmatpush2.msra.mxu0 0.0
      %909 = vmatprep.subr.mxu0 0.0
      %910 = vmatpush2.msra.mxu0 0.0
      %911 = vmatprep.subr.mxu0 0.0
      %912 = vmatpush2.msra.mxu0 0.0
      %913 = vmatprep.subr.mxu0 0.0
      %914 = vmatpush2.msra.mxu0 0.0
      %915 = vmatprep.subr.mxu0 0.0
      %916 = vmatpush2.msra.mxu0 0.0
      %917 = vmatprep.subr.mxu0 0.0
      %918 = vmatpush2.msra.mxu0 0.0
      %919 = vmatprep.subr.mxu0 0.0
      %920 = vmatpush2.msra.mxu0 0.0
      %921 = vmatprep.subr.mxu0 0.0
      %922 = vmatpush2.msra.mxu0 0.0
      %923 = vmatprep.subr.mxu0 0.0
      %924 = vmatpush2.msra.mxu0 0.0
      %925 = vmatprep.mubr.f32.mxu0 0.0
      %926 = vmatmul.mubr.f32.gmra.mxu0 %v856
      %v927 = vpop.f32.mrf.mxu0
      %v928 = vadd.f32 %v853, %v927
      %v929 = vpop.f32.mrf.mxu0
      %930 = vmatprep.mubr.f32.mxu0 0.0
      %931 = vmatmul.mubr.f32.gmra.mxu0 %v859
      %v932 = vpop.f32.mrf.mxu0
      %v933 = vadd.f32 %v853, %v932
      %v934 = vpop.f32.mrf.mxu0
      %935 = vdwg.mxu0
      %v936 = vsel %vm465, %v928, 0.0
      %937 = vadd.xlane.f32.xlu0 %v936
      %v938 = vpop.xlane.xlu0 %937
      %v939 = vsel %vm465, %v933, 0.0
      %940 = vadd.xlane.f32.xlu0 %v939
      %v941 = vpop.xlane.xlu0 %940
      %v942 = vrcp.pop 32.0
      %v943 = vmul.f32 %v938, %v942
      %v944 = vmul.f32 %v941, %v942
      %v945 = vsub.f32 %v928, %v943
      %v946 = vsub.f32 %v933, %v944
      %v947 = vmul.f32 %v945, %v945
      %v948 = vmul.f32 %v946, %v946
      %v949 = vsel %vm465, %v947, 0.0
      %950 = vadd.xlane.f32.xlu0 %v949
      %v951 = vpop.xlane.xlu0 %950
      %v952 = vsel %vm465, %v948, 0.0
      %953 = vadd.xlane.f32.xlu0 %v952
      %v954 = vpop.xlane.xlu0 %953
      %v955 = vmul.f32 %v951, %v942
      %v956 = vmul.f32 %v954, %v942
      %v957 = vadd.f32 %v955, 1e-05
      %v958 = vadd.f32 %v956, 1e-05
      %v959 = vrsqrt.pop %v957
      %v960 = vrsqrt.pop %v958
      %v961 = vmul.f32 %v945, %v959
      %v962 = vmul.f32 %v946, %v960
      %v963 = vld [vmem:[%s13] sm:$0x1]
      %v965 = vlaneseq
      %v966 = vshrl.u32 %v965, 7
      %v967 = vsub.s32 0, %v966
      %v968 = vrot.slane %v963, %v967
      %v970 = vmul.f32 %v961, %v968
      %v971 = vmul.f32 %v962, %v968
      %v972 = vld [vmem:[%s14] sm:$0x1]
      %v974 = vlaneseq
      %v975 = vshrl.u32 %v974, 7
      %v976 = vsub.s32 0, %v975
      %v977 = vrot.slane %v972, %v976
      %v979 = vadd.f32 %v970, %v977
      %v980 = vadd.f32 %v971, %v977
      %981 = vst.msk [vmem:[#allocation3] sm:$0xff] %vm465, %v979
      %982 = vst.msk [vmem:[#allocation3 + $0x8] sm:$0xff] %vm465, %v980
    $region69: #{message_passing.1} parent=1 // pred_fallthru
      _
    // Predicated region
    $region70: #{message_passing.1} parent=1 // pred_check
      _
    $region71: #{message_passing.1} parent=1 // pred_check_branch
      %984 = sbr.rel (0) target = $region73
    $region72: #{message_passing.1} parent=1 // pred_region
      %s986 = ssub.s32 256, 256
      %987 = vsyncadd [#allocation4], %s986
      %s988 = sshll.u32 [#allocation3], 4
      %s989 = int_to_ptr.vmem [resolvable:$true] %s988
      %994 = dma.vmem_to_hbm [thread:$0]  %s989, 256, %s15, [#allocation4], 128, 128, 8
    $region73: #{message_passing.1} parent=1 // pred_fallthru
      _
    // Predicated region
    $region74: #{message_passing.1} parent=1 // pred_check
      _
    $region75: #{message_passing.1} parent=1 // pred_check_branch
      %996 = sbr.rel (0) target = $region77
    $region76: #{message_passing.1} parent=1 // pred_region
      %997 = dma.done [#allocation4], 256
    $region77: #{message_passing.1} parent=1 // pred_fallthru
      _
    %998 = vsyncpa [#allocation4], 1

</llo_original>
